<compile_context>
chip_gen: v5e
topology: v5e:2x2
jax: 0.10.0
libtpu: 0.0.40
codegen_flags: <defaults>
</compile_context>

<pallas_src>
import functools
import math

import jax
import jax.numpy as jnp
from jax.experimental import pallas as pl
from jax.experimental.pallas import tpu as pltpu

LANE = 128


def _round_up(x, m):
    return ((x + m - 1) // m) * m


def _vmem_budget():
    """Returns (physical VMEM, vmem_limit_bytes, tile-selection byte budget)."""
    cap = 64 * 1024 * 1024  # conservative default == v7x per-TC VMEM
    try:
        info = pltpu.get_tpu_info()
        cap = int(getattr(info, "vmem_capacity_bytes", cap))
    except Exception:
        pass
    # 48 MiB on v7x (64 MiB physical), 96 MiB on v5e/v6e (128 MiB physical).
    limit = max(min(int(cap * 0.75), cap - (16 << 20)), 32 << 20)
    budget = int(limit * 0.8)  # headroom for Mosaic internal scratch
    return cap, limit, budget


def _pick_tile_m(M, KKC, Cout_p, out_isize, budget):
    """Row-tile (flattened output pixels) for the im2col path, multiple of 8."""
    kkc_vmem = _round_up(KKC, LANE)          # VMEM lane padding of the patches tile
    kkc_w = _round_up(KKC, 16)               # sublane padding of the weight tile
    cap = max(8, min(4096, _round_up(M, 8)))
    for cand in range(cap, 7, -8):
        use = (3 * cand * kkc_vmem * 2       # patches block (<=3-deep pipeline)
               + 2 * cand * Cout_p * out_isize   # output block (double-buffered)
               + cand * Cout_p * 4           # f32 matmul result
               + kkc_w * Cout_p * 2          # weights (single-buffered)
               + 4 * Cout_p * 4)
        if use <= budget:
            return cand
    return 8


def _pick_tile_h(Ho, Wp, Wo, Cin, Cout_p, K, out_isize, budget):
    """Output-row tile for the general path, multiple of 16 (SUB_H = tile/2)."""
    cin_vmem = _round_up(Cin, LANE)          # VMEM lane padding of the x window
    cin_w = _round_up(Cin, 16)               # sublane padding of the weight tile
    wp_vmem = _round_up(Wp, 8)
    cap = max(16, min(512, _round_up(Ho, 16)))
    for cand in range(cap, 15, -16):
        sub = cand // 2
        use = (2 * (sub + K - 1) * wp_vmem * cin_vmem * 2   # double-buffered halo windows
               + 2 * cand * Wo * Cout_p * out_isize         # output block (double-buffered)
               + sub * Wo * Cout_p * 4                      # f32 accumulator scratch
               + K * K * cin_w * Cout_p * 2                 # weights (single-buffered)
               + 4 * Cout_p * 4)
        if use <= budget:
            return cand
    return 16


# --------------------------------------------------------------------------- #
# Kernels
# --------------------------------------------------------------------------- #
def _im2col_kernel(p_ref, w_ref, sb_ref, o_ref, *, relu6):
    """Small-Cin path: one MXU matmul per tile.

    p_ref : (1, TILE_M, K*K*Cin)  bf16 im2col patches
    w_ref : (K*K*Cin, Cout_p)     bf16 un-scaled conv weights
    sb_ref: (2, Cout_p)           f32  row0 = BN scale, row1 = fused bias
    o_ref : (1, TILE_M, Cout_p)
    """
    acc = jnp.dot(p_ref[0], w_ref[...], preferred_element_type=jnp.float32)
    y = acc * sb_ref[0:1, :] + sb_ref[1:2, :]
    y = jnp.maximum(y, 0.0)
    if relu6:
        y = jnp.minimum(y, 6.0)
    o_ref[0] = y.astype(o_ref.dtype)


def _general_kernel(x_hbm, w_ref, sb_ref, o_ref, xbuf, acc_ref, sem,
                    *, K, TILE_H, SUB_H, Wo, relu6):
    """General path: one (n, row-tile) grid step.

    x_hbm : (N, Hp_need, Wp, Cin)  bf16, raw HBM ref (pl.ANY) -- manual halo DMA
    w_ref : (K*K, Cin, Cout_p)     bf16, un-scaled, single-buffered
    sb_ref: (2, Cout_p)            f32 BN scale / fused bias
    o_ref : (1, TILE_H*Wo, Cout_p)
    xbuf  : (2, SUB_H+K-1, Wp, Cin) VMEM double buffer for halo'd row windows
    acc_ref: (SUB_H*Wo, Cout_p)    f32 accumulator scratch
    sem   : DMA semaphores, one per buffer slot
    """
    n = pl.program_id(0)
    t = pl.program_id(1)
    halo = K - 1
    n_sub = TILE_H // SUB_H

    def window_copy(s, slot):
        # halo'd input rows for output rows [t*TILE_H + s*SUB_H, ... + SUB_H)
        row = pl.multiple_of(t * TILE_H + s * SUB_H, 8)
        return pltpu.make_async_copy(
            x_hbm.at[n, pl.ds(row, SUB_H + halo)], xbuf.at[slot], sem.at[slot])

    window_copy(0, 0).start()
    for s in range(n_sub):                      # static unroll (n_sub == 2)
        slot = s % 2
        if s + 1 < n_sub:                       # prefetch the next half-tile
            window_copy(s + 1, 1 - slot).start()
        window_copy(s, slot).wait()

        # K*K shifted matmuls: bf16 operands, f32 accumulation in VMEM scratch.
        for kh in range(K):
            for kw in range(K):
                xs = xbuf[slot, kh:kh + SUB_H, kw:kw + Wo, :]
                xs = xs.reshape(SUB_H * Wo, xs.shape[-1])
                contrib = jnp.dot(xs, w_ref[kh * K + kw],
                                  preferred_element_type=jnp.float32)
                if kh == 0 and kw == 0:
                    acc_ref[...] = contrib
                else:
                    acc_ref[...] += contrib

        # BN (scale/bias on the f32 accumulator) + ReLU, lane-dense store.
        y = acc_ref[...] * sb_ref[0:1, :] + sb_ref[1:2, :]
        y = jnp.maximum(y, 0.0)
        if relu6:
            y = jnp.minimum(y, 6.0)
        o_ref[0, s * SUB_H * Wo:(s + 1) * SUB_H * Wo, :] = y.astype(o_ref.dtype)


# --------------------------------------------------------------------------- #
# Wrappers
# --------------------------------------------------------------------------- #
def conv_bn_relu_nhwc(x, conv_w, conv_b, bn_gamma, bn_beta, bn_mean, bn_var, *,
                      stride=1, padding=0, dilation=1, groups=1, relu6=False,
                      eps=1e-5, out_dtype=jnp.float32):
    """Fused Conv2d + BatchNorm(inference) + ReLU(6).

    x      : (N, H, W, Cin) NHWC
    conv_w : (Cout, Cin, K, K) PyTorch OIHW layout
    conv_b : (Cout,)
    Returns (N, Ho, Wo, Cout) NHWC in `out_dtype`.
    """
    # TODO(synk): stride>1 / dilation / groups / training-mode BN not implemented.
    assert stride == 1 and dilation == 1 and groups == 1, \
        "only stride=1, dilation=1, groups=1 implemented in the Pallas path"

    N, H, W, Cin = x.shape
    Cout, Cin_w, K, K2 = conv_w.shape
    assert Cin_w == Cin and K == K2
    Ho = H + 2 * padding - K + 1
    Wo = W + 2 * padding - K + 1
    Wp = W + 2 * padding
    assert Ho > 0 and Wo > 0
    Cout_p = _round_up(Cout, LANE)
    out_isize = jnp.dtype(out_dtype).itemsize

    cap, vmem_limit, budget = _vmem_budget()
    deep_x_pipe = cap >= (100 << 20)   # v5e/v6e (128 MiB VMEM): 3-deep activation pipeline

    # Inference-mode BN as a per-channel (scale, bias) applied in the f32 epilogue.
    scale = (bn_gamma / jnp.sqrt(bn_var + eps)).astype(jnp.float32)
    bias = ((conv_b - bn_mean) * scale + bn_beta).astype(jnp.float32)
    sb = jnp.pad(jnp.stack([scale, bias]), ((0, 0), (0, Cout_p - Cout)))   # (2, Cout_p) f32

    compiler_params = pltpu.CompilerParams(
        dimension_semantics=("parallel", "parallel"),
        vmem_limit_bytes=vmem_limit)
    cost = pl.CostEstimate(
        flops=int(2 * N * Ho * Wo * K * K * Cin * Cout_p + 3 * N * Ho * Wo * Cout_p),
        transcendentals=0,
        bytes_accessed=int(N * H * W * Cin * 2 + K * K * Cin * Cout_p * 2
                           + 2 * Cout_p * 4 + N * Ho * Wo * Cout_p * out_isize))

    x_bf16 = x.astype(jnp.bfloat16)

    if K * K * Cin <= LANE:
        # ------------------------------------------------------------------ #
        # Small-Cin path: taps packed into the contraction dim (im2col), one
        # MXU matmul per row tile, fully BlockSpec-pipelined.
        # ------------------------------------------------------------------ #
        KKC = K * K * Cin
        xp = jnp.pad(x_bf16, ((0, 0), (padding, padding), (padding, padding), (0, 0)))
        cols = [xp[:, kh:kh + Ho, kw:kw + Wo, :] for kh in range(K) for kw in range(K)]
        patches = jnp.concatenate(cols, axis=-1).reshape(N, Ho * Wo, KKC)

        M = Ho * Wo
        tile_m = _pick_tile_m(M, KKC, Cout_p, out_isize, budget)
        M_pad = _round_up(M, tile_m)
        if M_pad != M:
            patches = jnp.pad(patches, ((0, 0), (0, M_pad - M), (0, 0)))

        w = jnp.transpose(conv_w, (2, 3, 1, 0)).reshape(KKC, Cout)   # (K,K,Cin,Cout)->(KKC,Cout)
        w = jnp.pad(w, ((0, 0), (0, Cout_p - Cout))).astype(jnp.bfloat16)

        grid_spec = pltpu.PrefetchScalarGridSpec(
            num_scalar_prefetch=0,
            grid=(N, M_pad // tile_m),
            in_specs=[
                pl.BlockSpec((1, tile_m, KKC), lambda n, m: (n, m, 0),
                             pipeline_mode=pl.Buffered(3) if deep_x_pipe else None),
                pl.BlockSpec((KKC, Cout_p), lambda n, m: (0, 0),
                             pipeline_mode=pl.Buffered(1)),
                pl.BlockSpec((2, Cout_p), lambda n, m: (0, 0),
                             pipeline_mode=pl.Buffered(1)),
            ],
            out_specs=pl.BlockSpec((1, tile_m, Cout_p), lambda n, m: (n, m, 0)),
        )
        raw = pl.pallas_call(
            functools.partial(_im2col_kernel, relu6=relu6),
            out_shape=jax.ShapeDtypeStruct((N, M_pad, Cout_p), out_dtype),
            grid_spec=grid_spec,
            compiler_params=compiler_params,
            cost_estimate=cost,
        )(patches, w, sb)
        return raw[:, :M, :Cout].reshape(N, Ho, Wo, Cout)

    # ---------------------------------------------------------------------- #
    # General path: no Cin padding in HBM, halo'd row tiles via manual DMA,
    # K*K shifted MXU matmuls, f32 scratch accumulator.
    # ---------------------------------------------------------------------- #
    tile_h = _pick_tile_h(Ho, Wp, Wo, Cin, Cout_p, K, out_isize, budget)
    sub_h = tile_h // 2
    Ho_pad = _round_up(Ho, tile_h)
    T = Ho_pad // tile_h
    Hp_need = Ho_pad + K - 1           # rows the last tile's halo window may touch

    xg = jnp.pad(x_bf16, ((0, 0), (padding, Hp_need - H - padding),
                          (padding, padding), (0, 0)))           # (N, Hp_need, Wp, Cin)

    w = jnp.transpose(conv_w, (2, 3, 1, 0))                      # (K, K, Cin, Cout)
    w = jnp.pad(w, ((0, 0), (0, 0), (0, 0), (0, Cout_p - Cout)))
    w = w.reshape(K * K, Cin, Cout_p).astype(jnp.bfloat16)

    grid_spec = pltpu.PrefetchScalarGridSpec(
        num_scalar_prefetch=0,
        grid=(N, T),
        in_specs=[
            pl.BlockSpec(memory_space=pl.ANY),                   # x: manual halo'd DMA
            pl.BlockSpec((K * K, Cin, Cout_p), lambda n, t: (0, 0, 0),
                         pipeline_mode=pl.Buffered(1)),
            pl.BlockSpec((2, Cout_p), lambda n, t: (0, 0),
                         pipeline_mode=pl.Buffered(1)),
        ],
        out_specs=pl.BlockSpec((1, tile_h * Wo, Cout_p), lambda n, t: (n, t, 0)),
        scratch_shapes=[
            pltpu.VMEM((2, sub_h + K - 1, Wp, Cin), jnp.bfloat16),   # halo'd x windows
            pltpu.VMEM((sub_h * Wo, Cout_p), jnp.float32),           # f32 accumulator
            pltpu.SemaphoreType.DMA((2,)),
        ],
    )
    raw = pl.pallas_call(
        functools.partial(_general_kernel, K=K, TILE_H=tile_h, SUB_H=sub_h,
                          Wo=Wo, relu6=relu6),
        out_shape=jax.ShapeDtypeStruct((N, Ho_pad * Wo, Cout_p), out_dtype),
        grid_spec=grid_spec,
        compiler_params=compiler_params,
        cost_estimate=cost,
    )(xg, w, sb)
    return raw[:, :Ho * Wo, :Cout].reshape(N, Ho, Wo, Cout)


def conv_bn_relu_nchw(x_nchw, conv_w, conv_b, bn_gamma, bn_beta, bn_mean, bn_var, **kw):
    """PyTorch-layout convenience wrapper (adds two transposes).  For chained
    blocks prefer `conv_bn_relu_nhwc` and keep the whole network NHWC -- that
    removes two full HBM round trips per layer."""
    x = jnp.transpose(x_nchw, (0, 2, 3, 1))
    y = conv_bn_relu_nhwc(x, conv_w, conv_b, bn_gamma, bn_beta, bn_mean, bn_var, **kw)
    return jnp.transpose(y, (0, 3, 1, 2))


# --------------------------------------------------------------------------- #
# Pure-JAX reference and self-test
# --------------------------------------------------------------------------- #
def conv_bn_relu_ref(x, w, b, gamma, beta, mean, var, *, padding=0, eps=1e-5):
    y = jax.lax.conv_general_dilated(
        x, w, window_strides=(1, 1),
        padding=[(padding, padding), (padding, padding)],
        dimension_numbers=("NCHW", "OIHW", "NCHW"),
        precision=jax.lax.Precision.HIGHEST)
    y = y + b[None, :, None, None]
    scale = gamma / jnp.sqrt(var + eps)
    y = (y - mean[None, :, None, None]) * scale[None, :, None, None] + beta[None, :, None, None]
    return jnp.maximum(y, 0.0)


if __name__ == "__main__":
    key = jax.random.PRNGKey(0)

    def make_case(k, N, Cin, H, W, Cout, K):
        kx, kw, kb = jax.random.split(k, 3)
        x = jax.random.normal(kx, (N, Cin, H, W), jnp.float32)
        # kaiming_normal_(mode='fan_out', relu): std = sqrt(2 / (Cout*K*K))
        w = jax.random.normal(kw, (Cout, Cin, K, K), jnp.float32) * jnp.sqrt(2.0 / (Cout * K * K))
        bound = 1.0 / math.sqrt(Cin * K * K)
        b = jax.random.uniform(kb, (Cout,), jnp.float32, minval=-bound, maxval=bound)
        # Round x / w to bf16 so the f32 reference sees exactly the values the
        # bf16 MXU path consumes (isolates accumulation-order error only).
        x = x.astype(jnp.bfloat16).astype(jnp.float32)
        w = w.astype(jnp.bfloat16).astype(jnp.float32)
        gamma = jnp.ones((Cout,), jnp.float32)      # BN init from the module
        beta = jnp.zeros((Cout,), jnp.float32)
        mean = jnp.zeros((Cout,), jnp.float32)
        var = jnp.ones((Cout,), jnp.float32)
        return x, w, b, gamma, beta, mean, var

    k1, k2 = jax.random.split(key)

    # Case 1: module-like small shapes -> small-Cin (im2col) path.
    N, Cin, H, W, Cout, K, padding = 2, 4, 16, 16, 8, 3, 1
    args = make_case(k1, N, Cin, H, W, Cout, K)
    out = jax.block_until_ready(conv_bn_relu_nchw(*args, padding=padding))
    ref = conv_bn_relu_ref(*args, padding=padding)
    assert out.shape == (N, Cout, H, W), out.shape
    err = float(jnp.max(jnp.abs(out.astype(jnp.float32) - ref)))
    assert err < 2e-2, f"im2col path mismatch vs reference, max_err={err}"

    # Case 2: larger Cin -> general (halo row-tiled, manual-DMA) path.
    N, Cin, H, W, Cout, K, padding = 2, 32, 16, 16, 16, 3, 1
    args = make_case(k2, N, Cin, H, W, Cout, K)
    out = jax.block_until_ready(conv_bn_relu_nchw(*args, padding=padding))
    ref = conv_bn_relu_ref(*args, padding=padding)
    assert out.shape == (N, Cout, H, W), out.shape
    err = float(jnp.max(jnp.abs(out.astype(jnp.float32) - ref)))
    assert err < 2e-2, f"general path mismatch vs reference, max_err={err}"

    print("KERNEL_OK")
</pallas_src>

<mosaic_0001>
module attributes {stable_mosaic.version = 11 : i64} {
  func.func @_im2col_kernel(%arg0: i32, %arg1: i32, %arg2: memref<1x256x36xbf16, #tpu.memory_space<vmem>>, %arg3: memref<36x128xbf16, #tpu.memory_space<vmem>>, %arg4: memref<2x128xf32, #tpu.memory_space<vmem>>, %arg5: memref<1x256x128xf32, #tpu.memory_space<vmem>>) attributes {dimension_semantics = [#tpu.dimension_semantics<parallel>, #tpu.dimension_semantics<parallel>], iteration_bounds = array<i64: 2, 1>, scalar_prefetch = 0 : i64, scratch_operands = 0 : i64, tpu.core_type = #tpu.core_type<tc>, window_params = [{transform_indices = @transform_0, window_bounds = array<i64: 1, 256, 36>}, {pipeline_mode = #tpu.pipeline_mode<synchronous>, transform_indices = @transform_1, window_bounds = array<i64: 36, 128>}, {pipeline_mode = #tpu.pipeline_mode<synchronous>, transform_indices = @transform_2, window_bounds = array<i64: 2, 128>}, {transform_indices = @transform_3, window_bounds = array<i64: 1, 256, 128>}]} {
    %c0 = arith.constant 0 : index
    %c0_0 = arith.constant 0 : index
    %c0_1 = arith.constant 0 : index
    %0 = vector.load %arg2[%c0, %c0_0, %c0_1] : memref<1x256x36xbf16, #tpu.memory_space<vmem>>, vector<1x256x36xbf16>
    %1 = vector.shape_cast %0 : vector<1x256x36xbf16> to vector<256x36xbf16>
    %c0_2 = arith.constant 0 : index
    %c0_3 = arith.constant 0 : index
    %2 = vector.load %arg3[%c0_2, %c0_3] : memref<36x128xbf16, #tpu.memory_space<vmem>>, vector<36x128xbf16>
    %cst = arith.constant dense<0.000000e+00> : vector<256x128xf32>
    %3 = tpu.matmul %1, %2, %cst {dimension_numbers = #tpu.dot_dimension_numbers<[1], [0], [0], [1], [0, 0, 1, 1], [], []>} : vector<256x36xbf16>, vector<36x128xbf16>, vector<256x128xf32> -> vector<256x128xf32>
    %c0_4 = arith.constant 0 : index
    %c0_5 = arith.constant 0 : index
    %4 = vector.load %arg4[%c0_4, %c0_5] : memref<2x128xf32, #tpu.memory_space<vmem>>, vector<1x128xf32>
    %5 = vector.broadcast %4 : vector<1x128xf32> to vector<256x128xf32>
    %6 = arith.mulf %3, %5 : vector<256x128xf32>
    %c1 = arith.constant 1 : index
    %c0_6 = arith.constant 0 : index
    %7 = vector.load %arg4[%c1, %c0_6] : memref<2x128xf32, #tpu.memory_space<vmem>>, vector<1x128xf32>
    %8 = vector.broadcast %7 : vector<1x128xf32> to vector<256x128xf32>
    %9 = arith.addf %6, %8 : vector<256x128xf32>
    %cst_7 = arith.constant 0.000000e+00 : f32
    %10 = vector.broadcast %cst_7 : f32 to vector<256x128xf32>
    %11 = arith.maximumf %9, %10 : vector<256x128xf32>
    %c0_8 = arith.constant 0 : index
    %c0_9 = arith.constant 0 : index
    %c0_10 = arith.constant 0 : index
    %12 = vector.load %arg5[%c0_8, %c0_9, %c0_10] : memref<1x256x128xf32, #tpu.memory_space<vmem>>, vector<1x256x128xf32>
    %13 = vector.shape_cast %12 : vector<1x256x128xf32> to vector<256x128xf32>
    %14 = vector.shape_cast %11 : vector<256x128xf32> to vector<1x256x128xf32>
    tpu.vector_store %arg5[%c0_8, %c0_9, %c0_10], %14 {strides = array<i32>} : memref<1x256x128xf32, #tpu.memory_space<vmem>>, vector<1x256x128xf32>,
    return
  }
  func.func @transform_0(%arg0: i32, %arg1: i32) -> (i32, i32, i32) {
    %c0_i32 = arith.constant 0 : i32
    %c0_i32_0 = arith.constant 0 : i32
    return %arg0, %arg1, %c0_i32 : i32, i32, i32
  }
  func.func @transform_1(%arg0: i32, %arg1: i32) -> (i32, i32) {
    %c0_i32 = arith.constant 0 : i32
    %c0_i32_0 = arith.constant 0 : i32
    %c0_i32_1 = arith.constant 0 : i32
    return %c0_i32, %c0_i32_0 : i32, i32
  }
  func.func @transform_2(%arg0: i32, %arg1: i32) -> (i32, i32) {
    %c0_i32 = arith.constant 0 : i32
    %c0_i32_0 = arith.constant 0 : i32
    %c0_i32_1 = arith.constant 0 : i32
    return %c0_i32, %c0_i32_0 : i32, i32
  }
  func.func @transform_3(%arg0: i32, %arg1: i32) -> (i32, i32, i32) {
    %c0_i32 = arith.constant 0 : i32
    %c0_i32_0 = arith.constant 0 : i32
    return %arg0, %arg1, %c0_i32 : i32, i32, i32
  }
}

</mosaic_0001>

<llo_original>
// kernel: tpu_custom_call.1
$region0: #{tpu_custom_call.1}
  #allocation0 [shape = 'u32[]', space=smem, size = 0x4, offset = 0x4, fixed_abs, tag = 'smem constant byte address 0x4 - core index']
  #allocation1 [shape = 'u32[72,128]{1,0:T(1,128)}', space=vmem, size = 0x9000, scoped, tag = 'internal scratch']
  %s0 = inlined_call_operand.vmem [shape: bf16[2,256,36], index: 0, kind: input, shape index: {}]
  %s1 = inlined_call_operand.vmem [shape: bf16[36,128], index: 1, kind: input, shape index: {}]
  %s2 = inlined_call_operand.vmem [shape: f32[2,128], index: 2, kind: input, shape index: {}]
  %s3 = inlined_call_operand.hbm [shape: f32[2,256,128], index: 3, kind: output, shape index: {}]
  %s4 = sld [smem:[#allocation0]]
  $region45: #{tpu_custom_call.1} parent=0
    _
  %s6 = ssub.s32 1, %s4
  %s7 = scalar_select 0, %s6, %s4
  $region1: #{tpu_custom_call.1} parent=0
    #allocation2 [shape = 'u8[262144]{0}', space=vmem, size = 0x40000, scoped, tag = 'output window, operand 0']
    #allocation3 [shape = 's32[2]{0}', space=sflag, size = 0x8, scoped, tag = 'scoped memory for tpu_custom_call.1']
    %8 = vsyncpa [#allocation3], 0
    %s9 = scalar_lea.sflag [#allocation3], 1
    %10 = vsyncpa %s9, 0
    loop: start=0, step=1, limit=4
    $region2: #{tpu_custom_call.1} parent=1 // loop_pre_header
      _
    $region3: #{tpu_custom_call.1} parent=1 // loop_header
      %s12 = sphi 0, %s16
      %p13 = scmp.ge.s32.totalorder %s12, 4
      %s19 = sphi 0, %s31
      %s20 = sphi 0, %s27
      %s21 = sphi 0, %s19
      %s22 = sphi 0, %s20
      %s23 = sphi 0, %s21
      %s24 = sphi 0, %s22
      %s36 = sphi 0, %s38
      %s39 = sphi 0, %s36
      %s40 = sphi 0, %s39
      %s56 = sphi 0, %s40
      %s60 = sphi 0, %s60
      %s62 = sphi 0, %s60
      %s63 = sphi 0, %s62
      %s77 = sphi 0, %s63
      %s81 = sphi 0, %s81
      %s83 = sphi 0, %s81
      %s84 = sphi 0, %s83
      %s98 = sphi 0, %s84
      %s106 = sphi 0, %s108
      %s109 = sphi 0, %s106
      %s110 = sphi 0, %s109
      %s126 = sphi 0, %s110
    $region4: #{tpu_custom_call.1} parent=1 // loop_header_branch
      %15 = sbr.rel (%p13) target = $region8
    $region5: #{tpu_custom_call.1} parent=1 // loop_body
      %s17 = ssub.s32 %s12, 1
      %s18 = ssub.s32 %s12, 2
      %s25 = sadd.s32 1, %s20
      %p26 = scmp.ge.s32.totalorder %s25, 1
      %s27 = scalar_select %p26, 0, %s25
      %s28 = sadd.s32 1, %s19
      %s29 = scalar_select %p26, %s28, %s19
      %p30 = scmp.ge.s32.totalorder %s29, 2
      %s31 = scalar_select %p30, 0, %s29
      %s32 = ssub.s32 %s19, %s31
      %s33 = ssub.s32 %s20, %s27
      %s34 = sor.u32 %s32, %s33
      %p35 = scmp.eq.s32.totalorder %s34, 0
      %s37 = sadd.s32 %s36, 1
      %s38 = scalar_select %p35, %s36, %s37
      %p41 = pneg %p35
      %p42 = scmp.eq.s32.totalorder %s12, 1
      %p43 = por %p41, %p42
      %p44 = scmp.ne.s32.totalorder %s36, %s39
      %p45 = scmp.eq.s32.totalorder %s12, 0
      %p46 = por %p44, %p45
      %p47 = scmp.ne.s32.totalorder %s36, %s39
      %p48 = scmp.eq.s32.totalorder %s17, 1
      %p49 = por %p47, %p48
      %p50 = scmp.ne.s32.totalorder %s39, %s40
      %p51 = scmp.eq.s32.totalorder %s17, 0
      %p52 = por %p50, %p51
      %p53 = scmp.ne.s32.totalorder %s39, %s40
      %p54 = scmp.eq.s32.totalorder %s18, 1
      %p55 = por %p53, %p54
      %p57 = scmp.ne.s32.totalorder %s40, %s56
      %p58 = scmp.eq.s32.totalorder %s18, 0
      %p59 = por %p57, %p58
      %s61 = sadd.s32 %s60, 1
      %p64 = scmp.eq.s32.totalorder %s12, 1
      %p65 = scmp.ne.s32.totalorder %s60, %s62
      %p66 = scmp.eq.s32.totalorder %s12, 0
      %p67 = por %p65, %p66
      %p68 = scmp.ne.s32.totalorder %s60, %s62
      %p69 = scmp.eq.s32.totalorder %s17, 1
      %p70 = por %p68, %p69
      %p71 = scmp.ne.s32.totalorder %s62, %s63
      %p72 = scmp.eq.s32.totalorder %s17, 0
      %p73 = por %p71, %p72
      %p74 = scmp.ne.s32.totalorder %s62, %s63
      %p75 = scmp.eq.s32.totalorder %s18, 1
      %p76 = por %p74, %p75
      %p78 = scmp.ne.s32.totalorder %s63, %s77
      %p79 = scmp.eq.s32.totalorder %s18, 0
      %p80 = por %p78, %p79
      %s82 = sadd.s32 %s81, 1
      %p85 = scmp.eq.s32.totalorder %s12, 1
      %p86 = scmp.ne.s32.totalorder %s81, %s83
      %p87 = scmp.eq.s32.totalorder %s12, 0
      %p88 = por %p86, %p87
      %p89 = scmp.ne.s32.totalorder %s81, %s83
      %p90 = scmp.eq.s32.totalorder %s17, 1
      %p91 = por %p89, %p90
      %p92 = scmp.ne.s32.totalorder %s83, %s84
      %p93 = scmp.eq.s32.totalorder %s17, 0
      %p94 = por %p92, %p93
      %p95 = scmp.ne.s32.totalorder %s83, %s84
      %p96 = scmp.eq.s32.totalorder %s18, 1
      %p97 = por %p95, %p96
      %p99 = scmp.ne.s32.totalorder %s84, %s98
      %p100 = scmp.eq.s32.totalorder %s18, 0
      %p101 = por %p99, %p100
      %s102 = ssub.s32 %s19, %s31
      %s103 = ssub.s32 %s20, %s27
      %s104 = sor.u32 %s102, %s103
      %p105 = scmp.eq.s32.totalorder %s104, 0
      %s107 = sadd.s32 %s106, 1
      %s108 = scalar_select %p105, %s106, %s107
      %p111 = pneg %p105
      %p112 = scmp.eq.s32.totalorder %s12, 1
      %p113 = por %p111, %p112
      %p114 = scmp.ne.s32.totalorder %s106, %s109
      %p115 = scmp.eq.s32.totalorder %s12, 0
      %p116 = por %p114, %p115
      %p117 = scmp.ne.s32.totalorder %s106, %s109
      %p118 = scmp.eq.s32.totalorder %s17, 1
      %p119 = por %p117, %p118
      %p120 = scmp.ne.s32.totalorder %s109, %s110
      %p121 = scmp.eq.s32.totalorder %s17, 0
      %p122 = por %p120, %p121
      %p123 = scmp.ne.s32.totalorder %s109, %s110
      %p124 = scmp.eq.s32.totalorder %s18, 1
      %p125 = por %p123, %p124
      %p127 = scmp.ne.s32.totalorder %s110, %s126
      %p128 = scmp.eq.s32.totalorder %s18, 0
      %p129 = por %p127, %p128
      %p130 = scmp.le.s32.totalorder 1, %s12
      %p131 = scmp.lt.s32.totalorder %s12, 3
      %p132 = pnand %p130, %p131
      %p133 = pneg %p132
      // Predicated region
      $region9: #{tpu_custom_call.1} parent=5 // pred_check
        _
      $region10: #{tpu_custom_call.1} parent=5 // pred_check_branch
        %135 = sbr.rel (%p132) target = $region12
      $region11: #{tpu_custom_call.1} parent=5 // pred_region
        %s136 = ssub.s32 %s12, 1
        // Predicated region
        $region13: #{tpu_custom_call.1} parent=11 // pred_check
          %p137 = pneg %p73
        $region14: #{tpu_custom_call.1} parent=11 // pred_check_branch
          %139 = sbr.rel (%p137) target = $region16
        $region15: #{tpu_custom_call.1} parent=11 // pred_region
          _
        $region16: #{tpu_custom_call.1} parent=11 // pred_fallthru
          _
        // Predicated region
        $region17: #{tpu_custom_call.1} parent=11 // pred_check
          %p140 = pneg %p94
        $region18: #{tpu_custom_call.1} parent=11 // pred_check_branch
          %142 = sbr.rel (%p140) target = $region20
        $region19: #{tpu_custom_call.1} parent=11 // pred_region
          _
        $region20: #{tpu_custom_call.1} parent=11 // pred_fallthru
          _
      $region12: #{tpu_custom_call.1} parent=5 // pred_fallthru
        _
      %p143 = scmp.lt.s32.totalorder %s12, 2
      // Predicated region
      $region21: #{tpu_custom_call.1} parent=5 // pred_check
        %p144 = pneg %p143
      $region22: #{tpu_custom_call.1} parent=5 // pred_check_branch
        %146 = sbr.rel (%p144) target = $region24
      $region23: #{tpu_custom_call.1} parent=5 // pred_region
        // Predicated region
        $region25: #{tpu_custom_call.1} parent=23 // pred_check
          %p147 = pneg %p46
        $region26: #{tpu_custom_call.1} parent=23 // pred_check_branch
          %149 = sbr.rel (%p147) target = $region28
        $region27: #{tpu_custom_call.1} parent=23 // pred_region
          %s150 = smul.u32 32, %s20
          %p151 = scmp.lt.s32.totalorder %s19, 1
          %s152 = scalar_select %p151, %s19, 1
          %p153 = scmp.lt.s32.totalorder %s150, 31
          %s154 = scalar_select %p153, %s150, 31
          %s155 = smul.addr %s152, 32
          %s156 = sadd.s32 %s154, %s155
          %s157 = smul.addr %s156, 4
          %s158 = scalar_lea.vmem %s0, %s157
          %s159 = smul.u32 32, %s20
        $region28: #{tpu_custom_call.1} parent=23 // pred_fallthru
          _
      $region24: #{tpu_custom_call.1} parent=5 // pred_fallthru
        _
      %p160 = scmp.le.s32.totalorder 1, %s12
      %p161 = scmp.lt.s32.totalorder %s12, 3
      %p162 = pnand %p160, %p161
      %p163 = pneg %p162
      // Predicated region
      $region29: #{tpu_custom_call.1} parent=5 // pred_check
        _
      $region30: #{tpu_custom_call.1} parent=5 // pred_check_branch
        %165 = sbr.rel (%p162) target = $region32
      $region31: #{tpu_custom_call.1} parent=5 // pred_region
        %s166 = ssub.s32 %s12, 1
        %s167 = smul.u32 32, %s22
        %p168 = scmp.lt.s32.totalorder %s21, 1
        %s169 = scalar_select %p168, %s21, 1
        %p170 = scmp.lt.s32.totalorder %s167, 31
        %s171 = scalar_select %p170, %s167, 31
        %s172 = smul.addr %s169, 32
        %s173 = sadd.s32 %s171, %s172
        %s174 = smul.addr %s173, 4
        %s175 = scalar_lea.vmem %s0, %s174
        %p176 = pneg %p52
        %p177 = pneg %p49
        %p178 = pneg %p73
        %p179 = pneg %p70
        %p180 = pneg %p94
        %p181 = pneg %p91
        %p182 = pneg %p122
        %p183 = pneg %p119
        %s184 = sand.u32 %s109, 1
        %s185 = scalar_lea.sflag [#allocation3], %s184
        %s186 = sand.u32 %s109, 1
        %s187 = smul.addr %s186, 256
        %s188 = scalar_lea.vmem [#allocation2], %s187
        %s189 = smul.u32 32, %s22
        %p190 = scmp.lt.s32.totalorder %s21, 1
        %s191 = scalar_select %p190, %s21, 1
        %p192 = scmp.lt.s32.totalorder %s189, 31
        %s193 = scalar_select %p192, %s189, 31
        %s194 = smul.addr %s191, 32
        %s195 = sadd.s32 %s193, %s194
        %s196 = smul.addr %s195, 4
        %s197 = scalar_lea.vmem %s0, %s196
        %s198 = smul.u32 32, %s22
        %s199 = smul.u32 32, %s22
        %v201 = vld [vmem:[%s197] sm:$0xf]
        %v202 = vld [vmem:[%s197 + $0x4] sm:$0xf]
        %v203 = vld [vmem:[%s197 + $0x8] sm:$0xf]
        %v204 = vld [vmem:[%s197 + $0xc] sm:$0xf]
        %v205 = vld [vmem:[%s197 + $0x10] sm:$0xf]
        %v206 = vld [vmem:[%s197 + $0x14] sm:$0xf]
        %v207 = vld [vmem:[%s197 + $0x18] sm:$0xf]
        %v208 = vld [vmem:[%s197 + $0x1c] sm:$0xf]
        %v209 = vld [vmem:[%s197 + $0x20] sm:$0xf]
        %v210 = vld [vmem:[%s197 + $0x24] sm:$0xf]
        %v211 = vld [vmem:[%s197 + $0x28] sm:$0xf]
        %v212 = vld [vmem:[%s197 + $0x2c] sm:$0xf]
        %v213 = vld [vmem:[%s197 + $0x30] sm:$0xf]
        %v214 = vld [vmem:[%s197 + $0x34] sm:$0xf]
        %v215 = vld [vmem:[%s197 + $0x38] sm:$0xf]
        %v216 = vld [vmem:[%s197 + $0x3c] sm:$0xf]
        %v217 = vld [vmem:[%s197 + $0x40] sm:$0xf]
        %v218 = vld [vmem:[%s197 + $0x44] sm:$0xf]
        %v219 = vld [vmem:[%s197 + $0x48] sm:$0xf]
        %v220 = vld [vmem:[%s197 + $0x4c] sm:$0xf]
        %v221 = vld [vmem:[%s197 + $0x50] sm:$0xf]
        %v222 = vld [vmem:[%s197 + $0x54] sm:$0xf]
        %v223 = vld [vmem:[%s197 + $0x58] sm:$0xf]
        %v224 = vld [vmem:[%s197 + $0x5c] sm:$0xf]
        %v225 = vld [vmem:[%s197 + $0x60] sm:$0xf]
        %v226 = vld [vmem:[%s197 + $0x64] sm:$0xf]
        %v227 = vld [vmem:[%s197 + $0x68] sm:$0xf]
        %v228 = vld [vmem:[%s197 + $0x6c] sm:$0xf]
        %v229 = vld [vmem:[%s197 + $0x70] sm:$0xf]
        %v230 = vld [vmem:[%s197 + $0x74] sm:$0xf]
        %v231 = vld [vmem:[%s197 + $0x78] sm:$0xf]
        %v232 = vld [vmem:[%s197 + $0x7c] sm:$0xf]
        %v233 = vld [vmem:[%s1] sm:$0xf]
        %v234 = vld [vmem:[%s1 + $0x4] sm:$0xf]
        %v235 = vld [vmem:[%s1 + $0x8] sm:$0xf]
        %v236 = vld [vmem:[%s1 + $0xc] sm:$0xf]
        %v237 = vld [vmem:[%s1 + $0x10] sm:$0x3]
        %v270 = vunpack.c.l.b16 %v201
        %v271 = vunpack.c.l.b16 %v202
        %v272 = vunpack.c.l.b16 %v203
        %v273 = vunpack.c.l.b16 %v204
        %v274 = vunpack.c.l.b16 %v205
        %v275 = vunpack.c.l.b16 %v206
        %v276 = vunpack.c.l.b16 %v207
        %v277 = vunpack.c.l.b16 %v208
        %v278 = vunpack.c.l.b16 %v209
        %v279 = vunpack.c.l.b16 %v210
        %v280 = vunpack.c.l.b16 %v211
        %v281 = vunpack.c.l.b16 %v212
        %v282 = vunpack.c.l.b16 %v213
        %v283 = vunpack.c.l.b16 %v214
        %v284 = vunpack.c.l.b16 %v215
        %v285 = vunpack.c.l.b16 %v216
        %v286 = vunpack.c.l.b16 %v217
        %v287 = vunpack.c.l.b16 %v218
        %v288 = vunpack.c.l.b16 %v219
        %v289 = vunpack.c.l.b16 %v220
        %v290 = vunpack.c.l.b16 %v221
        %v291 = vunpack.c.l.b16 %v222
        %v292 = vunpack.c.l.b16 %v223
        %v293 = vunpack.c.l.b16 %v224
        %v294 = vunpack.c.l.b16 %v225
        %v295 = vunpack.c.l.b16 %v226
        %v296 = vunpack.c.l.b16 %v227
        %v297 = vunpack.c.l.b16 %v228
        %v298 = vunpack.c.l.b16 %v229
        %v299 = vunpack.c.l.b16 %v230
        %v300 = vunpack.c.l.b16 %v231
        %v301 = vunpack.c.l.b16 %v232
        %v302 = vpack.c.b16 %v271, %v270
        %v303 = vpack.c.b16 %v273, %v272
        %v304 = vpack.c.b16 %v275, %v274
        %v305 = vpack.c.b16 %v277, %v276
        %v306 = vpack.c.b16 %v279, %v278
        %v307 = vpack.c.b16 %v281, %v280
        %v308 = vpack.c.b16 %v283, %v282
        %v309 = vpack.c.b16 %v285, %v284
        %v310 = vpack.c.b16 %v287, %v286
        %v311 = vpack.c.b16 %v289, %v288
        %v312 = vpack.c.b16 %v291, %v290
        %v313 = vpack.c.b16 %v293, %v292
        %v314 = vpack.c.b16 %v295, %v294
        %v315 = vpack.c.b16 %v297, %v296
        %v316 = vpack.c.b16 %v299, %v298
        %v317 = vpack.c.b16 %v301, %v300
        %v323 = vunpack.c.l.b16 %v233
        %v324 = vunpack.c.l.b16 %v234
        %v325 = vunpack.c.l.b16 %v235
        %v326 = vunpack.c.l.b16 %v236
        %v327 = vunpack.c.l.b16 %v237
        %v328 = vpack.c.b16 %v324, %v323
        %v329 = vpack.c.b16 %v326, %v325
        %v330 = vpack.c.b16 %v327, %v327
        %vm333 = vcmask 293888
        %v335 = vsel %vm333, %v302, 0
        %v338 = vsel %vm333, %v303, 0
        %v341 = vsel %vm333, %v304, 0
        %v344 = vsel %vm333, %v305, 0
        %v347 = vsel %vm333, %v306, 0
        %v350 = vsel %vm333, %v307, 0
        %v353 = vsel %vm333, %v308, 0
        %v356 = vsel %vm333, %v309, 0
        %v359 = vsel %vm333, %v310, 0
        %v362 = vsel %vm333, %v311, 0
        %v365 = vsel %vm333, %v312, 0
        %v368 = vsel %vm333, %v313, 0
        %v371 = vsel %vm333, %v314, 0
        %v374 = vsel %vm333, %v315, 0
        %v377 = vsel %vm333, %v316, 0
        %v380 = vsel %vm333, %v317, 0
        %vm382 = vcmask 1041408
        %v384 = vsel %vm382, %v330, 0
        %386 = vmatpush.bf16.msra.mxu0 0
        %387 = vmatpush.bf16.msra.mxu0 0
        %388 = vmatpush.bf16.msra.mxu0 0
        %389 = vmatpush.bf16.msra.mxu0 0
        %390 = vmatpush.bf16.msra.mxu0 0
        %391 = vmatpush.bf16.msra.mxu0 %v384
        %392 = vmatpush.bf16.msra.mxu0 %v329
        %393 = vmatpush.bf16.msra.mxu0 %v328
        %394 = vmatmul.bf16.gmra.mxu0 %v335
        %v395 = vpop.f32.mrf.mxu0
        %v396 = vadd.f32 0.0, %v395
        %v397 = vpop.f32.mrf.mxu0
        %v398 = vadd.f32 0.0, %v397
        %399 = vmatmul.bf16.gmra.mxu0 %v338
        %v400 = vpop.f32.mrf.mxu0
        %v401 = vadd.f32 0.0, %v400
        %v402 = vpop.f32.mrf.mxu0
        %v403 = vadd.f32 0.0, %v402
        %404 = vmatmul.bf16.gmra.mxu0 %v341
        %v405 = vpop.f32.mrf.mxu0
        %v406 = vadd.f32 0.0, %v405
        %v407 = vpop.f32.mrf.mxu0
        %v408 = vadd.f32 0.0, %v407
        %409 = vmatmul.bf16.gmra.mxu0 %v344
        %v410 = vpop.f32.mrf.mxu0
        %v411 = vadd.f32 0.0, %v410
        %v412 = vpop.f32.mrf.mxu0
        %v413 = vadd.f32 0.0, %v412
        %414 = vmatmul.bf16.gmra.mxu0 %v347
        %v415 = vpop.f32.mrf.mxu0
        %v416 = vadd.f32 0.0, %v415
        %v417 = vpop.f32.mrf.mxu0
        %v418 = vadd.f32 0.0, %v417
        %419 = vmatmul.bf16.gmra.mxu0 %v350
        %v420 = vpop.f32.mrf.mxu0
        %v421 = vadd.f32 0.0, %v420
        %v422 = vpop.f32.mrf.mxu0
        %v423 = vadd.f32 0.0, %v422
        %424 = vmatmul.bf16.gmra.mxu0 %v353
        %v425 = vpop.f32.mrf.mxu0
        %v426 = vadd.f32 0.0, %v425
        %v427 = vpop.f32.mrf.mxu0
        %v428 = vadd.f32 0.0, %v427
        %429 = vmatmul.bf16.gmra.mxu0 %v356
        %v430 = vpop.f32.mrf.mxu0
        %v431 = vadd.f32 0.0, %v430
        %v432 = vpop.f32.mrf.mxu0
        %v433 = vadd.f32 0.0, %v432
        %434 = vmatmul.bf16.gmra.mxu0 %v359
        %v435 = vpop.f32.mrf.mxu0
        %v436 = vadd.f32 0.0, %v435
        %v437 = vpop.f32.mrf.mxu0
        %v438 = vadd.f32 0.0, %v437
        %439 = vmatmul.bf16.gmra.mxu0 %v362
        %v440 = vpop.f32.mrf.mxu0
        %v441 = vadd.f32 0.0, %v440
        %v442 = vpop.f32.mrf.mxu0
        %v443 = vadd.f32 0.0, %v442
        %444 = vmatmul.bf16.gmra.mxu0 %v365
        %v445 = vpop.f32.mrf.mxu0
        %v446 = vadd.f32 0.0, %v445
        %v447 = vpop.f32.mrf.mxu0
        %v448 = vadd.f32 0.0, %v447
        %449 = vmatmul.bf16.gmra.mxu0 %v368
        %v450 = vpop.f32.mrf.mxu0
        %v451 = vadd.f32 0.0, %v450
        %v452 = vpop.f32.mrf.mxu0
        %v453 = vadd.f32 0.0, %v452
        %454 = vmatmul.bf16.gmra.mxu0 %v371
        %v455 = vpop.f32.mrf.mxu0
        %v456 = vadd.f32 0.0, %v455
        %v457 = vpop.f32.mrf.mxu0
        %v458 = vadd.f32 0.0, %v457
        %459 = vmatmul.bf16.gmra.mxu0 %v374
        %v460 = vpop.f32.mrf.mxu0
        %v461 = vadd.f32 0.0, %v460
        %v462 = vpop.f32.mrf.mxu0
        %v463 = vadd.f32 0.0, %v462
        %464 = vmatmul.bf16.gmra.mxu0 %v377
        %v465 = vpop.f32.mrf.mxu0
        %v466 = vadd.f32 0.0, %v465
        %v467 = vpop.f32.mrf.mxu0
        %v468 = vadd.f32 0.0, %v467
        %469 = vmatmul.bf16.gmra.mxu0 %v380
        %v470 = vpop.f32.mrf.mxu0
        %v471 = vadd.f32 0.0, %v470
        %v472 = vpop.f32.mrf.mxu0
        %v473 = vadd.f32 0.0, %v472
        %474 = vdwg.mxu0
        %v475 = vld [vmem:[%s2] sm:$0x1]
        %v476 = vperm.slane %v475, 0
        %v477 = vmul.f32 %v396, %v476
        %v478 = vmul.f32 %v398, %v476
        %v479 = vmul.f32 %v401, %v476
        %v480 = vmul.f32 %v403, %v476
        %v481 = vmul.f32 %v406, %v476
        %v482 = vmul.f32 %v408, %v476
        %v483 = vmul.f32 %v411, %v476
        %v484 = vmul.f32 %v413, %v476
        %v485 = vmul.f32 %v416, %v476
        %v486 = vmul.f32 %v418, %v476
        %v487 = vmul.f32 %v421, %v476
        %v488 = vmul.f32 %v423, %v476
        %v489 = vmul.f32 %v426, %v476
        %v490 = vmul.f32 %v428, %v476
        %v491 = vmul.f32 %v431, %v476
        %v492 = vmul.f32 %v433, %v476
        %v493 = vmul.f32 %v436, %v476
        %v494 = vmul.f32 %v438, %v476
        %v495 = vmul.f32 %v441, %v476
        %v496 = vmul.f32 %v443, %v476
        %v497 = vmul.f32 %v446, %v476
        %v498 = vmul.f32 %v448, %v476
        %v499 = vmul.f32 %v451, %v476
        %v500 = vmul.f32 %v453, %v476
        %v501 = vmul.f32 %v456, %v476
        %v502 = vmul.f32 %v458, %v476
        %v503 = vmul.f32 %v461, %v476
        %v504 = vmul.f32 %v463, %v476
        %v505 = vmul.f32 %v466, %v476
        %v506 = vmul.f32 %v468, %v476
        %v507 = vmul.f32 %v471, %v476
        %v508 = vmul.f32 %v473, %v476
        %v509 = vld [vmem:[%s2 + $0x1] sm:$0x1]
        %v510 = vperm.slane %v509, 0
        %v511 = vadd.f32 %v477, %v510
        %v512 = vadd.f32 %v478, %v510
        %v513 = vadd.f32 %v479, %v510
        %v514 = vadd.f32 %v480, %v510
        %v515 = vadd.f32 %v481, %v510
        %v516 = vadd.f32 %v482, %v510
        %v517 = vadd.f32 %v483, %v510
        %v518 = vadd.f32 %v484, %v510
        %v519 = vadd.f32 %v485, %v510
        %v520 = vadd.f32 %v486, %v510
        %v521 = vadd.f32 %v487, %v510
        %v522 = vadd.f32 %v488, %v510
        %v523 = vadd.f32 %v489, %v510
        %v524 = vadd.f32 %v490, %v510
        %v525 = vadd.f32 %v491, %v510
        %v526 = vadd.f32 %v492, %v510
        %v527 = vadd.f32 %v493, %v510
        %v528 = vadd.f32 %v494, %v510
        %v529 = vadd.f32 %v495, %v510
        %v530 = vadd.f32 %v496, %v510
        %v531 = vadd.f32 %v497, %v510
        %v532 = vadd.f32 %v498, %v510
        %v533 = vadd.f32 %v499, %v510
        %v534 = vadd.f32 %v500, %v510
        %v535 = vadd.f32 %v501, %v510
        %v536 = vadd.f32 %v502, %v510
        %v537 = vadd.f32 %v503, %v510
        %v538 = vadd.f32 %v504, %v510
        %v539 = vadd.f32 %v505, %v510
        %v540 = vadd.f32 %v506, %v510
        %v541 = vadd.f32 %v507, %v510
        %v542 = vadd.f32 %v508, %v510
        %v543 = vmax.f32 %v511, 0.0
        %v544 = vmax.f32 %v512, 0.0
        %v545 = vmax.f32 %v513, 0.0
        %v546 = vmax.f32 %v514, 0.0
        %v547 = vmax.f32 %v515, 0.0
        %v548 = vmax.f32 %v516, 0.0
        %v549 = vmax.f32 %v517, 0.0
        %v550 = vmax.f32 %v518, 0.0
        %v551 = vmax.f32 %v519, 0.0
        %v552 = vmax.f32 %v520, 0.0
        %v553 = vmax.f32 %v521, 0.0
        %v554 = vmax.f32 %v522, 0.0
        %v555 = vmax.f32 %v523, 0.0
        %v556 = vmax.f32 %v524, 0.0
        %v557 = vmax.f32 %v525, 0.0
        %v558 = vmax.f32 %v526, 0.0
        %v559 = vmax.f32 %v527, 0.0
        %v560 = vmax.f32 %v528, 0.0
        %v561 = vmax.f32 %v529, 0.0
        %v562 = vmax.f32 %v530, 0.0
        %v563 = vmax.f32 %v531, 0.0
        %v564 = vmax.f32 %v532, 0.0
        %v565 = vmax.f32 %v533, 0.0
        %v566 = vmax.f32 %v534, 0.0
        %v567 = vmax.f32 %v535, 0.0
        %v568 = vmax.f32 %v536, 0.0
        %v569 = vmax.f32 %v537, 0.0
        %v570 = vmax.f32 %v538, 0.0
        %v571 = vmax.f32 %v539, 0.0
        %v572 = vmax.f32 %v540, 0.0
        %v573 = vmax.f32 %v541, 0.0
        %v574 = vmax.f32 %v542, 0.0
        %575 = vst [vmem:[%s188] sm:$0xff] %v543
        %576 = vst [vmem:[%s188 + $0x8] sm:$0xff] %v544
        %577 = vst [vmem:[%s188 + $0x10] sm:$0xff] %v545
        %578 = vst [vmem:[%s188 + $0x18] sm:$0xff] %v546
        %579 = vst [vmem:[%s188 + $0x20] sm:$0xff] %v547
        %580 = vst [vmem:[%s188 + $0x28] sm:$0xff] %v548
        %581 = vst [vmem:[%s188 + $0x30] sm:$0xff] %v549
        %582 = vst [vmem:[%s188 + $0x38] sm:$0xff] %v550
        %583 = vst [vmem:[%s188 + $0x40] sm:$0xff] %v551
        %584 = vst [vmem:[%s188 + $0x48] sm:$0xff] %v552
        %585 = vst [vmem:[%s188 + $0x50] sm:$0xff] %v553
        %586 = vst [vmem:[%s188 + $0x58] sm:$0xff] %v554
        %587 = vst [vmem:[%s188 + $0x60] sm:$0xff] %v555
        %588 = vst [vmem:[%s188 + $0x68] sm:$0xff] %v556
        %589 = vst [vmem:[%s188 + $0x70] sm:$0xff] %v557
        %590 = vst [vmem:[%s188 + $0x78] sm:$0xff] %v558
        %591 = vst [vmem:[%s188 + $0x80] sm:$0xff] %v559
        %592 = vst [vmem:[%s188 + $0x88] sm:$0xff] %v560
        %593 = vst [vmem:[%s188 + $0x90] sm:$0xff] %v561
        %594 = vst [vmem:[%s188 + $0x98] sm:$0xff] %v562
        %595 = vst [vmem:[%s188 + $0xa0] sm:$0xff] %v563
        %596 = vst [vmem:[%s188 + $0xa8] sm:$0xff] %v564
        %597 = vst [vmem:[%s188 + $0xb0] sm:$0xff] %v565
        %598 = vst [vmem:[%s188 + $0xb8] sm:$0xff] %v566
        %599 = vst [vmem:[%s188 + $0xc0] sm:$0xff] %v567
        %600 = vst [vmem:[%s188 + $0xc8] sm:$0xff] %v568
        %601 = vst [vmem:[%s188 + $0xd0] sm:$0xff] %v569
        %602 = vst [vmem:[%s188 + $0xd8] sm:$0xff] %v570
        %603 = vst [vmem:[%s188 + $0xe0] sm:$0xff] %v571
        %604 = vst [vmem:[%s188 + $0xe8] sm:$0xff] %v572
        %605 = vst [vmem:[%s188 + $0xf0] sm:$0xff] %v573
        %606 = vst [vmem:[%s188 + $0xf8] sm:$0xff] %v574
        %s607 = sand.u32 %s109, 1
        %s608 = scalar_lea.sflag [#allocation3], %s607
        %s609 = sand.u32 %s109, 1
        %s610 = smul.addr %s609, 256
        %s611 = scalar_lea.vmem [#allocation2], %s610
        // Predicated region
        $region33: #{tpu_custom_call.1} parent=31 // pred_check
          %p612 = pneg %p119
        $region34: #{tpu_custom_call.1} parent=31 // pred_check_branch
          %614 = sbr.rel (%p612) target = $region36
        $region35: #{tpu_custom_call.1} parent=31 // pred_region
          %s615 = smul.u32 32, %s22
          %617 = vsyncadd %s608, 0
          %s618 = smul.addr %s21, 32
          %s619 = sadd.s32 %s615, %s618
          %s620 = smul.addr %s619, 8
          %s621 = scalar_lea.hbm %s3, %s620
          %s622 = sshll.u32 %s611, 4
          %s623 = int_to_ptr.vmem [resolvable:$true] %s622
          %s624 = sshll.u32 %s621, 4
          %s625 = int_to_ptr.hbm [resolvable:$true] %s624
          %630 = dma.vmem_to_hbm [thread:$0]  %s623, 4096, %s625, %s608, 128, 128, 8
        $region36: #{tpu_custom_call.1} parent=31 // pred_fallthru
          _
      $region32: #{tpu_custom_call.1} parent=5 // pred_fallthru
        _
      %p631 = scmp.le.s32.totalorder 2, %s12
      // Predicated region
      $region37: #{tpu_custom_call.1} parent=5 // pred_check
        %p632 = pneg %p631
      $region38: #{tpu_custom_call.1} parent=5 // pred_check_branch
        %634 = sbr.rel (%p632) target = $region40
      $region39: #{tpu_custom_call.1} parent=5 // pred_region
        %s635 = ssub.s32 %s12, 2
        // Predicated region
        $region41: #{tpu_custom_call.1} parent=39 // pred_check
          %p636 = pneg %p125
        $region42: #{tpu_custom_call.1} parent=39 // pred_check_branch
          %638 = sbr.rel (%p636) target = $region44
        $region43: #{tpu_custom_call.1} parent=39 // pred_region
          %s639 = sand.u32 %s110, 1
          %s640 = scalar_lea.sflag [#allocation3], %s639
          %s641 = sand.u32 %s110, 1
          %s642 = smul.addr %s641, 256
          %s643 = scalar_lea.vmem [#allocation2], %s642
          %645 = dma.done %s640, 4096
        $region44: #{tpu_custom_call.1} parent=39 // pred_fallthru
          _
      $region40: #{tpu_custom_call.1} parent=5 // pred_fallthru
        _
    $region6: #{tpu_custom_call.1} parent=1 // loop_footer
      %s16 = sadd.s32 1, %s12
    $region7: #{tpu_custom_call.1} parent=1 // loop_footer_branch
      %11 = sbr.rel target = $region3
    $region8: #{tpu_custom_call.1} parent=1 // loop_exit
      _
    %646 = vsyncpa [#allocation3], 1
    %s647 = scalar_lea.sflag [#allocation3], 1
    %648 = vsyncpa %s647, 1

</llo_original>
